<compile_context>
chip_gen: v7x
topology: tpu7x:2x2x1
jax: 0.10.0
libtpu: 0.0.40
codegen_flags: <defaults>
</compile_context>

<pallas_src>
import jax
import jax.numpy as jnp
import numpy as np
from jax.experimental import pallas as pl
from jax.experimental.pallas import tpu as pltpu

# Static "vocab ids" for '▁no' / '▁yes' (deterministic module constants).
NO_ID = 10
YES_ID = 42

LANE = 128  # lane-dense output width (cols 0/1 = logits, col 2 = KL row sum)


def seqclf_kernel(x_ref, mask_ref, w_ref, lab_ref, out_ref):
    tile_b = out_ref.shape[0]

    x = x_ref[...].astype(jnp.float32)   # (TILE_B, S, D)  bf16 -> f32 for pooling
    m = mask_ref[...]                    # (TILE_B, S)     f32, already mask/count
    w = w_ref[...]                       # (D, 2)          bf16 lm_head cols [no, yes]
    lab = lab_ref[...]                   # (TILE_B, 2)     f32 soft labels (0 = pad row)

    # --- pool-first: masked mean over the sequence (VPU mult + sublane reduce) ---
    # TODO(synk): the pretrained T5 encoder/decoder stack has no clean in-kernel
    # equivalent; a masked mean-pool stands in for the decoder-start hidden state.
    pooled = jnp.sum(x * m[:, :, None], axis=1)                        # (TILE_B, D)

    # --- tiny lm_head projection restricted to the two needed columns (MXU) -----
    sel = jnp.dot(pooled.astype(jnp.bfloat16), w,
                  preferred_element_type=jnp.float32)                  # (TILE_B, 2)

    # --- log_softmax (the reference applies it twice; it is idempotent on
    #     already-normalized log-probs, so a single pass is equivalent) ----------
    z = sel - jnp.max(sel, axis=-1, keepdims=True)
    lg = z - jnp.log(jnp.sum(jnp.exp(z), axis=-1, keepdims=True))      # (TILE_B, 2)

    # --- nn.KLDivLoss() pointwise terms: target * (log(target) - input),
    #     with 0 * log(0) := 0; reduced to one partial sum per batch row --------
    safe_lab = jnp.where(lab > 0, lab, 1.0)
    kl_row = jnp.sum(lab * jnp.log(safe_lab) - lab * lg,
                     axis=-1, keepdims=True)                           # (TILE_B, 1)

    # --- single lane-dense store: cols 0/1 = log-probs, col 2 = KL row sum ------
    lane = jax.lax.broadcasted_iota(jnp.int32, (tile_b, LANE), 1)
    out = jnp.where(lane == 0, lg[:, 0:1],
          jnp.where(lane == 1, lg[:, 1:2],
          jnp.where(lane == 2, kl_row, 0.0)))
    out_ref[...] = out


def _choose_tile_b(B, S, D, *, max_tile=512, x_tile_budget_bytes=4 << 20):
    """Pick a batch tile: as big as the VMEM budget allows, but >=2 grid tiles
    when possible so both v7x TensorCores get work under ("parallel",)."""
    bytes_per_row = max(S * D * 2, 1)                 # bf16 activation row
    cap = max(8, (x_tile_budget_bytes // bytes_per_row) // 8 * 8)
    half = (B + 1) // 2                               # aim for >= 2 tiles
    tile = ((half + 7) // 8) * 8
    return int(max(8, min(tile, cap, max_tile)))


def seqclf_forward(x_emb, attn_mask, w_lm, labels, *, tile_b=None):
    """x_emb (B,S,D) f32, attn_mask (B,S) f32 {0,1}, w_lm (D,V) f32, labels (B,2) f32."""
    B, S, D = x_emb.shape
    if tile_b is None:
        tile_b = _choose_tile_b(B, S, D)

    # --- gather only the '▁no' / '▁yes' lm_head columns; bf16 for the MXU -------
    w_sel = w_lm[:, jnp.array([NO_ID, YES_ID])].astype(jnp.bfloat16)   # (D, 2)

    # --- pad batch to a multiple of tile_b (padded rows: mask==0, labels==0) ----
    Bp = pl.cdiv(B, tile_b) * tile_b
    pad = Bp - B
    x_emb = jnp.pad(x_emb, ((0, pad), (0, 0), (0, 0)))
    attn_mask = jnp.pad(attn_mask, ((0, pad), (0, 0)))
    labels = jnp.pad(labels, ((0, pad), (0, 0))).astype(jnp.float32)

    # --- fold 1/count into the mask; guard all-pad rows against divide-by-zero --
    count = jnp.maximum(jnp.sum(attn_mask, axis=1, keepdims=True), 1.0)
    mask_norm = (attn_mask / count).astype(jnp.float32)                # (Bp, S)

    x_bf16 = x_emb.astype(jnp.bfloat16)                                # (Bp, S, D)

    num_tiles = Bp // tile_b
    grid_spec = pltpu.PrefetchScalarGridSpec(
        num_scalar_prefetch=0,
        grid=(num_tiles,),
        in_specs=[
            pl.BlockSpec((tile_b, S, D), lambda i: (i, 0, 0)),   # activations (bf16)
            pl.BlockSpec((tile_b, S), lambda i: (i, 0)),         # normalized mask
            pl.BlockSpec((D, 2), lambda i: (0, 0)),              # lm_head cols (resident)
            pl.BlockSpec((tile_b, 2), lambda i: (i, 0)),         # soft labels
        ],
        out_specs=pl.BlockSpec((tile_b, LANE), lambda i: (i, 0)),  # merged lane-dense out
    )
    out = pl.pallas_call(
        seqclf_kernel,
        out_shape=jax.ShapeDtypeStruct((Bp, LANE), jnp.float32),
        grid_spec=grid_spec,
        compiler_params=pltpu.CompilerParams(
            dimension_semantics=("parallel",),
            # 32 MiB is within every generation's physical VMEM (incl. v7x) and
            # removes the v5e 16 MiB scoped default as a tile-size ceiling.
            vmem_limit_bytes=32 * 1024 * 1024),
    )(x_bf16, mask_norm, w_sel, labels)

    logits = out[:B, :2]
    # nn.KLDivLoss() default reduction='mean' divides by the element count B*2;
    # padded rows carry zero labels and contribute exactly zero to the sum.
    loss = jnp.sum(out[:, 2]) / (B * 2)
    return logits, loss


if __name__ == "__main__":
    # Small shapes consistent with the forward: seq=8, hidden=32, vocab=256,
    # 2-way yes/no classification; batch=12 so the padded batch (16) spans two
    # "parallel" grid tiles of 8 rows each (keeps both v7x cores busy).
    B, S, D, V = 12, 8, 32, 256

    key = jax.random.PRNGKey(0)
    k_emb, k_w, k_ids, k_len, k_tgt = jax.random.split(key, 5)

    # Deterministic synthetic "parameters".
    emb_table = jax.random.normal(k_emb, (V, D), dtype=jnp.float32) * 0.02
    w_lm = jax.random.normal(k_w, (D, V), dtype=jnp.float32) * 0.02

    # Synthetic tokenized batch: input_ids + attention_mask with padding
    # (stands in for self.tok(...) output).
    input_ids = jax.random.randint(k_ids, (B, S), 0, V)
    lengths = jax.random.randint(k_len, (B,), 1, S + 1)               # >=1 real token/row
    attn_mask = (jnp.arange(S)[None, :] < lengths[:, None]).astype(jnp.float32)
    input_ids = input_ids * attn_mask.astype(jnp.int32)

    # targets -> soft labels [[1 - t, t]]
    targets = jax.random.bernoulli(k_tgt, 0.5, (B,)).astype(jnp.float32)
    labels = jnp.stack([1.0 - targets, targets], axis=-1)             # (B, 2)

    # Glue: tokenizer + embedding lookup (gather) stay in plain JAX.
    x_emb = emb_table[input_ids]                                      # (B, S, D)

    logits, loss = seqclf_forward(x_emb, attn_mask, w_lm, labels)
    jax.block_until_ready((logits, loss))

    # Pure-JAX reference of the same synthetic forward (f32, pool-then-project,
    # double log_softmax, full-vocab projection) for a correctness spot-check.
    def reference(x_emb, attn_mask, w_lm, labels):
        cnt = jnp.maximum(attn_mask.sum(axis=1, keepdims=True), 1.0)
        pooled = (x_emb * attn_mask[:, :, None]).sum(axis=1) / cnt
        vocab_logits = pooled @ w_lm
        sel = vocab_logits[:, jnp.array([NO_ID, YES_ID])]
        lg = jax.nn.log_softmax(jax.nn.log_softmax(sel, axis=-1), axis=-1)
        safe = jnp.where(labels > 0, labels, 1.0)
        kl = labels * jnp.log(safe) - labels * lg
        return lg, jnp.mean(kl)

    ref_logits, ref_loss = reference(x_emb, attn_mask, w_lm, labels)
    np.testing.assert_allclose(np.asarray(logits), np.asarray(ref_logits),
                               rtol=1e-2, atol=1e-3)
    np.testing.assert_allclose(np.asarray(loss), np.asarray(ref_loss),
                               rtol=1e-2, atol=1e-3)
    print("KERNEL_OK")
</pallas_src>

<mosaic_0001>
module attributes {stable_mosaic.version = 11 : i64} {
  func.func @seqclf_kernel(%arg0: i32, %arg1: memref<8x8x32xbf16, #tpu.memory_space<vmem>>, %arg2: memref<8x8xf32, #tpu.memory_space<vmem>>, %arg3: memref<32x2xbf16, #tpu.memory_space<vmem>>, %arg4: memref<8x2xf32, #tpu.memory_space<vmem>>, %arg5: memref<8x128xf32, #tpu.memory_space<vmem>>) attributes {dimension_semantics = [#tpu.dimension_semantics<parallel>], iteration_bounds = array<i64: 2>, scalar_prefetch = 0 : i64, scratch_operands = 0 : i64, tpu.core_type = #tpu.core_type<tc>, window_params = [{transform_indices = @transform_0, window_bounds = array<i64: 8, 8, 32>}, {transform_indices = @transform_1, window_bounds = array<i64: 8, 8>}, {pipeline_mode = #tpu.pipeline_mode<synchronous>, transform_indices = @transform_2, window_bounds = array<i64: 32, 2>}, {transform_indices = @transform_3, window_bounds = array<i64: 8, 2>}, {transform_indices = @transform_4, window_bounds = array<i64: 8, 128>}]} {
    %c0 = arith.constant 0 : index
    %c0_0 = arith.constant 0 : index
    %c0_1 = arith.constant 0 : index
    %0 = vector.load %arg1[%c0, %c0_0, %c0_1] : memref<8x8x32xbf16, #tpu.memory_space<vmem>>, vector<8x8x32xbf16>
    %1 = arith.extf %0 : vector<8x8x32xbf16> to vector<8x8x32xf32>
    %c0_2 = arith.constant 0 : index
    %c0_3 = arith.constant 0 : index
    %2 = vector.load %arg2[%c0_2, %c0_3] : memref<8x8xf32, #tpu.memory_space<vmem>>, vector<8x8xf32>
    %c0_4 = arith.constant 0 : index
    %c0_5 = arith.constant 0 : index
    %3 = vector.load %arg3[%c0_4, %c0_5] : memref<32x2xbf16, #tpu.memory_space<vmem>>, vector<32x2xbf16>
    %c0_6 = arith.constant 0 : index
    %c0_7 = arith.constant 0 : index
    %4 = vector.load %arg4[%c0_6, %c0_7] : memref<8x2xf32, #tpu.memory_space<vmem>>, vector<8x2xf32>
    %5 = vector.shape_cast %2 : vector<8x8xf32> to vector<8x8x1xf32>
    %6 = vector.broadcast %5 : vector<8x8x1xf32> to vector<8x8x32xf32>
    %7 = arith.mulf %1, %6 : vector<8x8x32xf32>
    %cst = arith.constant dense<0.000000e+00> : vector<8x32xf32>
    %8 = vector.multi_reduction <add>, %7, %cst [1] : vector<8x8x32xf32> to vector<8x32xf32>
    %9 = arith.truncf %8 : vector<8x32xf32> to vector<8x32xbf16>
    %cst_8 = arith.constant dense<0.000000e+00> : vector<8x2xf32>
    %10 = tpu.matmul %9, %3, %cst_8 {dimension_numbers = #tpu.dot_dimension_numbers<[1], [0], [0], [1], [0, 0, 1, 1], [], []>} : vector<8x32xbf16>, vector<32x2xbf16>, vector<8x2xf32> -> vector<8x2xf32>
    %cst_9 = arith.constant dense<0xFF800000> : vector<8xf32>
    %11 = vector.multi_reduction <maximumf>, %10, %cst_9 [1] : vector<8x2xf32> to vector<8xf32>
    %12 = vector.shape_cast %11 : vector<8xf32> to vector<8x1xf32>
    %13 = vector.broadcast %12 : vector<8x1xf32> to vector<8x2xf32>
    %14 = arith.subf %10, %13 : vector<8x2xf32>
    %15 = math.exp %14 : vector<8x2xf32>
    %cst_10 = arith.constant dense<0.000000e+00> : vector<8xf32>
    %16 = vector.multi_reduction <add>, %15, %cst_10 [1] : vector<8x2xf32> to vector<8xf32>
    %17 = vector.shape_cast %16 : vector<8xf32> to vector<8x1xf32>
    %18 = math.log %17 : vector<8x1xf32>
    %19 = vector.broadcast %18 : vector<8x1xf32> to vector<8x2xf32>
    %20 = arith.subf %14, %19 : vector<8x2xf32>
    %cst_11 = arith.constant 0.000000e+00 : f32
    %21 = vector.broadcast %cst_11 : f32 to vector<8x2xf32>
    %22 = arith.cmpf ogt, %4, %21 : vector<8x2xf32>
    %cst_12 = arith.constant 1.000000e+00 : f32
    %23 = vector.broadcast %cst_12 : f32 to vector<8x2xf32>
    %24 = arith.select %22, %4, %23 : vector<8x2xi1>, vector<8x2xf32>
    %25 = math.log %24 : vector<8x2xf32>
    %26 = arith.mulf %4, %25 : vector<8x2xf32>
    %27 = arith.mulf %4, %20 : vector<8x2xf32>
    %28 = arith.subf %26, %27 : vector<8x2xf32>
    %cst_13 = arith.constant dense<0.000000e+00> : vector<8xf32>
    %29 = vector.multi_reduction <add>, %28, %cst_13 [1] : vector<8x2xf32> to vector<8xf32>
    %30 = vector.shape_cast %29 : vector<8xf32> to vector<8x1xf32>
    %31 = tpu.iota {dimensions = array<i32: 1>} : vector<8x128xi32>
    %c0_i32 = arith.constant 0 : i32
    %32 = vector.broadcast %c0_i32 : i32 to vector<8x128xi32>
    %33 = arith.cmpi eq, %31, %32 : vector<8x128xi32>
    %34 = vector.extract_strided_slice %20 {offsets = [0, 0], sizes = [8, 1], strides = [1, 1]} : vector<8x2xf32> to vector<8x1xf32>
    %c1_i32 = arith.constant 1 : i32
    %35 = vector.broadcast %c1_i32 : i32 to vector<8x128xi32>
    %36 = arith.cmpi eq, %31, %35 : vector<8x128xi32>
    %37 = vector.extract_strided_slice %20 {offsets = [0, 1], sizes = [8, 1], strides = [1, 1]} : vector<8x2xf32> to vector<8x1xf32>
    %c2_i32 = arith.constant 2 : i32
    %38 = vector.broadcast %c2_i32 : i32 to vector<8x128xi32>
    %39 = arith.cmpi eq, %31, %38 : vector<8x128xi32>
    %cst_14 = arith.constant 0.000000e+00 : f32
    %40 = vector.shape_cast %30 : vector<8x1xf32> to vector<8x1xf32>
    %41 = vector.broadcast %40 : vector<8x1xf32> to vector<8x128xf32>
    %42 = vector.broadcast %cst_14 : f32 to vector<8x128xf32>
    %43 = arith.select %39, %41, %42 : vector<8x128xi1>, vector<8x128xf32>
    %44 = vector.shape_cast %37 : vector<8x1xf32> to vector<8x1xf32>
    %45 = vector.broadcast %44 : vector<8x1xf32> to vector<8x128xf32>
    %46 = arith.select %36, %45, %43 : vector<8x128xi1>, vector<8x128xf32>
    %47 = vector.shape_cast %34 : vector<8x1xf32> to vector<8x1xf32>
    %48 = vector.broadcast %47 : vector<8x1xf32> to vector<8x128xf32>
    %49 = arith.select %33, %48, %46 : vector<8x128xi1>, vector<8x128xf32>
    %c0_15 = arith.constant 0 : index
    %c0_16 = arith.constant 0 : index
    %50 = vector.load %arg5[%c0_15, %c0_16] : memref<8x128xf32, #tpu.memory_space<vmem>>, vector<8x128xf32>
    tpu.vector_store %arg5[%c0_15, %c0_16], %49 {strides = array<i32>} : memref<8x128xf32, #tpu.memory_space<vmem>>, vector<8x128xf32>,
    return
  }
  func.func @transform_0(%arg0: i32) -> (i32, i32, i32) {
    %c0_i32 = arith.constant 0 : i32
    %c0_i32_0 = arith.constant 0 : i32
    %c0_i32_1 = arith.constant 0 : i32
    return %arg0, %c0_i32, %c0_i32_0 : i32, i32, i32
  }
  func.func @transform_1(%arg0: i32) -> (i32, i32) {
    %c0_i32 = arith.constant 0 : i32
    %c0_i32_0 = arith.constant 0 : i32
    return %arg0, %c0_i32 : i32, i32
  }
  func.func @transform_2(%arg0: i32) -> (i32, i32) {
    %c0_i32 = arith.constant 0 : i32
    %c0_i32_0 = arith.constant 0 : i32
    %c0_i32_1 = arith.constant 0 : i32
    return %c0_i32, %c0_i32_0 : i32, i32
  }
  func.func @transform_3(%arg0: i32) -> (i32, i32) {
    %c0_i32 = arith.constant 0 : i32
    %c0_i32_0 = arith.constant 0 : i32
    return %arg0, %c0_i32 : i32, i32
  }
  func.func @transform_4(%arg0: i32) -> (i32, i32) {
    %c0_i32 = arith.constant 0 : i32
    %c0_i32_0 = arith.constant 0 : i32
    return %arg0, %c0_i32 : i32, i32
  }
}

</mosaic_0001>

<llo_original>
// kernel: tpu_custom_call.1
$region0: #{tpu_custom_call.1}
  #allocation0 [shape = 'u32[]', space=smem, size = 0x4, offset = 0x4, fixed_abs, tag = 'smem constant byte address 0x4 - core index']
  #allocation1 [shape = 'u32[144,128]{1,0:T(1,128)}', space=vmem, size = 0x12000, scoped, tag = 'internal scratch']
  %s0 = inlined_call_operand.hbm [shape: bf16[16,8,32], index: 0, kind: input, shape index: {}]
  %s1 = inlined_call_operand.vmem [shape: f32[16,8], index: 1, kind: input, shape index: {}]
  %s2 = inlined_call_operand.vmem [shape: bf16[32,2], index: 2, kind: input, shape index: {}]
  %s3 = inlined_call_operand.vmem [shape: f32[16,2], index: 3, kind: input, shape index: {}]
  %s4 = inlined_call_operand.hbm [shape: f32[16,128], index: 4, kind: output, shape index: {}]
  %s5 = sld [smem:[#allocation0]]
  $region53: #{tpu_custom_call.1} parent=0
    _
  %s7 = ssub.s32 1, %s5
  %s8 = scalar_select 0, %s7, %s5
  $region1: #{tpu_custom_call.1} parent=0
    #allocation2 [shape = 'u8[32768]{0}', space=vmem, size = 0x8000, scoped, tag = 'input window, operand 0']
    #allocation3 [shape = 's32[2]{0}', space=sflag, size = 0x8, scoped, tag = 'scoped memory for tpu_custom_call.1']
    #allocation4 [shape = 's32[2]{0}', space=sflag, size = 0x8, scoped, tag = 'scoped memory for tpu_custom_call.1']
    #allocation5 [shape = 'u8[8192]{0}', space=vmem, size = 0x2000, scoped, tag = 'output window, operand 0']
    %9 = vsyncpa [#allocation3], 0
    %s10 = scalar_lea.sflag [#allocation3], 1
    %11 = vsyncpa %s10, 0
    %12 = vsyncpa [#allocation4], 0
    %s13 = scalar_lea.sflag [#allocation4], 1
    %14 = vsyncpa %s13, 0
    loop: start=0, step=1, limit=4
    $region2: #{tpu_custom_call.1} parent=1 // loop_pre_header
      _
    $region3: #{tpu_custom_call.1} parent=1 // loop_header
      %s16 = sphi 0, %s20
      %p17 = scmp.ge.s32.totalorder %s16, 4
      %s26 = sphi 0, %s28
      %s29 = sphi 0, %s26
      %s30 = sphi 0, %s29
      %s46 = sphi 0, %s30
      %s52 = sphi 0, %s54
      %s55 = sphi 0, %s52
      %s56 = sphi 0, %s55
      %s72 = sphi 0, %s56
      %s76 = sphi 0, %s76
      %s78 = sphi 0, %s76
      %s79 = sphi 0, %s78
      %s93 = sphi 0, %s79
      %s99 = sphi 0, %s101
      %s102 = sphi 0, %s99
      %s103 = sphi 0, %s102
      %s119 = sphi 0, %s103
      %s125 = sphi 0, %s127
      %s128 = sphi 0, %s125
      %s129 = sphi 0, %s128
      %s145 = sphi 0, %s129
    $region4: #{tpu_custom_call.1} parent=1 // loop_header_branch
      %19 = sbr.rel (%p17) target = $region8
    $region5: #{tpu_custom_call.1} parent=1 // loop_body
      %s21 = ssub.s32 %s16, 1
      %s22 = ssub.s32 %s16, 2
      %s23 = sadd.s32 %s16, 1
      %s24 = ssub.s32 %s16, %s23
      %p25 = scmp.eq.s32.totalorder %s24, 0
      %s27 = sadd.s32 %s26, 1
      %s28 = scalar_select %p25, %s26, %s27
      %p31 = pneg %p25
      %p32 = scmp.eq.s32.totalorder %s16, 1
      %p33 = por %p31, %p32
      %p34 = scmp.ne.s32.totalorder %s26, %s29
      %p35 = scmp.eq.s32.totalorder %s16, 0
      %p36 = por %p34, %p35
      %p37 = scmp.ne.s32.totalorder %s26, %s29
      %p38 = scmp.eq.s32.totalorder %s21, 1
      %p39 = por %p37, %p38
      %p40 = scmp.ne.s32.totalorder %s29, %s30
      %p41 = scmp.eq.s32.totalorder %s21, 0
      %p42 = por %p40, %p41
      %p43 = scmp.ne.s32.totalorder %s29, %s30
      %p44 = scmp.eq.s32.totalorder %s22, 1
      %p45 = por %p43, %p44
      %p47 = scmp.ne.s32.totalorder %s30, %s46
      %p48 = scmp.eq.s32.totalorder %s22, 0
      %p49 = por %p47, %p48
      %s50 = ssub.s32 %s16, %s23
      %p51 = scmp.eq.s32.totalorder %s50, 0
      %s53 = sadd.s32 %s52, 1
      %s54 = scalar_select %p51, %s52, %s53
      %p57 = pneg %p51
      %p58 = scmp.eq.s32.totalorder %s16, 1
      %p59 = por %p57, %p58
      %p60 = scmp.ne.s32.totalorder %s52, %s55
      %p61 = scmp.eq.s32.totalorder %s16, 0
      %p62 = por %p60, %p61
      %p63 = scmp.ne.s32.totalorder %s52, %s55
      %p64 = scmp.eq.s32.totalorder %s21, 1
      %p65 = por %p63, %p64
      %p66 = scmp.ne.s32.totalorder %s55, %s56
      %p67 = scmp.eq.s32.totalorder %s21, 0
      %p68 = por %p66, %p67
      %p69 = scmp.ne.s32.totalorder %s55, %s56
      %p70 = scmp.eq.s32.totalorder %s22, 1
      %p71 = por %p69, %p70
      %p73 = scmp.ne.s32.totalorder %s56, %s72
      %p74 = scmp.eq.s32.totalorder %s22, 0
      %p75 = por %p73, %p74
      %s77 = sadd.s32 %s76, 1
      %p80 = scmp.eq.s32.totalorder %s16, 1
      %p81 = scmp.ne.s32.totalorder %s76, %s78
      %p82 = scmp.eq.s32.totalorder %s16, 0
      %p83 = por %p81, %p82
      %p84 = scmp.ne.s32.totalorder %s76, %s78
      %p85 = scmp.eq.s32.totalorder %s21, 1
      %p86 = por %p84, %p85
      %p87 = scmp.ne.s32.totalorder %s78, %s79
      %p88 = scmp.eq.s32.totalorder %s21, 0
      %p89 = por %p87, %p88
      %p90 = scmp.ne.s32.totalorder %s78, %s79
      %p91 = scmp.eq.s32.totalorder %s22, 1
      %p92 = por %p90, %p91
      %p94 = scmp.ne.s32.totalorder %s79, %s93
      %p95 = scmp.eq.s32.totalorder %s22, 0
      %p96 = por %p94, %p95
      %s97 = ssub.s32 %s16, %s23
      %p98 = scmp.eq.s32.totalorder %s97, 0
      %s100 = sadd.s32 %s99, 1
      %s101 = scalar_select %p98, %s99, %s100
      %p104 = pneg %p98
      %p105 = scmp.eq.s32.totalorder %s16, 1
      %p106 = por %p104, %p105
      %p107 = scmp.ne.s32.totalorder %s99, %s102
      %p108 = scmp.eq.s32.totalorder %s16, 0
      %p109 = por %p107, %p108
      %p110 = scmp.ne.s32.totalorder %s99, %s102
      %p111 = scmp.eq.s32.totalorder %s21, 1
      %p112 = por %p110, %p111
      %p113 = scmp.ne.s32.totalorder %s102, %s103
      %p114 = scmp.eq.s32.totalorder %s21, 0
      %p115 = por %p113, %p114
      %p116 = scmp.ne.s32.totalorder %s102, %s103
      %p117 = scmp.eq.s32.totalorder %s22, 1
      %p118 = por %p116, %p117
      %p120 = scmp.ne.s32.totalorder %s103, %s119
      %p121 = scmp.eq.s32.totalorder %s22, 0
      %p122 = por %p120, %p121
      %s123 = ssub.s32 %s16, %s23
      %p124 = scmp.eq.s32.totalorder %s123, 0
      %s126 = sadd.s32 %s125, 1
      %s127 = scalar_select %p124, %s125, %s126
      %p130 = pneg %p124
      %p131 = scmp.eq.s32.totalorder %s16, 1
      %p132 = por %p130, %p131
      %p133 = scmp.ne.s32.totalorder %s125, %s128
      %p134 = scmp.eq.s32.totalorder %s16, 0
      %p135 = por %p133, %p134
      %p136 = scmp.ne.s32.totalorder %s125, %s128
      %p137 = scmp.eq.s32.totalorder %s21, 1
      %p138 = por %p136, %p137
      %p139 = scmp.ne.s32.totalorder %s128, %s129
      %p140 = scmp.eq.s32.totalorder %s21, 0
      %p141 = por %p139, %p140
      %p142 = scmp.ne.s32.totalorder %s128, %s129
      %p143 = scmp.eq.s32.totalorder %s22, 1
      %p144 = por %p142, %p143
      %p146 = scmp.ne.s32.totalorder %s129, %s145
      %p147 = scmp.eq.s32.totalorder %s22, 0
      %p148 = por %p146, %p147
      %p149 = scmp.le.s32.totalorder 1, %s16
      %p150 = scmp.lt.s32.totalorder %s16, 3
      %p151 = pnand %p149, %p150
      %p152 = pneg %p151
      // Predicated region
      $region9: #{tpu_custom_call.1} parent=5 // pred_check
        _
      $region10: #{tpu_custom_call.1} parent=5 // pred_check_branch
        %154 = sbr.rel (%p151) target = $region12
      $region11: #{tpu_custom_call.1} parent=5 // pred_region
        %s155 = ssub.s32 %s16, 1
        // Predicated region
        $region13: #{tpu_custom_call.1} parent=11 // pred_check
          %p156 = pneg %p89
        $region14: #{tpu_custom_call.1} parent=11 // pred_check_branch
          %158 = sbr.rel (%p156) target = $region16
        $region15: #{tpu_custom_call.1} parent=11 // pred_region
          _
        $region16: #{tpu_custom_call.1} parent=11 // pred_fallthru
          _
      $region12: #{tpu_custom_call.1} parent=5 // pred_fallthru
        _
      %p159 = scmp.lt.s32.totalorder %s16, 2
      // Predicated region
      $region17: #{tpu_custom_call.1} parent=5 // pred_check
        %p160 = pneg %p159
      $region18: #{tpu_custom_call.1} parent=5 // pred_check_branch
        %162 = sbr.rel (%p160) target = $region20
      $region19: #{tpu_custom_call.1} parent=5 // pred_region
        // Predicated region
        $region21: #{tpu_custom_call.1} parent=19 // pred_check
          %p163 = pneg %p36
        $region22: #{tpu_custom_call.1} parent=19 // pred_check_branch
          %165 = sbr.rel (%p163) target = $region24
        $region23: #{tpu_custom_call.1} parent=19 // pred_region
          %s166 = sand.u32 %s26, 1
          %s167 = scalar_lea.sflag [#allocation3], %s166
          %s168 = sand.u32 %s26, 1
          %s169 = smul.addr %s168, 32
          %s170 = scalar_lea.vmem [#allocation2], %s169
          %s171 = smul.u32 8, %s16
          %s173 = ssub.s32 512, 512
          %174 = vsyncadd %s167, %s173
          %s175 = smul.addr %s171, 64
          %s176 = scalar_lea.hbm %s0, %s175
          %s177 = sshll.u32 %s170, 4
          %s178 = int_to_ptr.vmem [resolvable:$true] %s177
          %183 = dma.hbm_to_vmem [thread:$0]  %s176, 512, %s178, %s167, 64, 64, 4
        $region24: #{tpu_custom_call.1} parent=19 // pred_fallthru
          _
        // Predicated region
        $region25: #{tpu_custom_call.1} parent=19 // pred_check
          %p184 = pneg %p62
        $region26: #{tpu_custom_call.1} parent=19 // pred_check_branch
          %186 = sbr.rel (%p184) target = $region28
        $region27: #{tpu_custom_call.1} parent=19 // pred_region
          %p187 = scmp.lt.s32.totalorder %s16, 1
          %s188 = scalar_select %p187, %s16, 1
          %s189 = smul.addr %s188, 8
          %s190 = scalar_lea.vmem %s1, %s189
        $region28: #{tpu_custom_call.1} parent=19 // pred_fallthru
          _
        // Predicated region
        $region29: #{tpu_custom_call.1} parent=19 // pred_check
          %p191 = pneg %p109
        $region30: #{tpu_custom_call.1} parent=19 // pred_check_branch
          %193 = sbr.rel (%p191) target = $region32
        $region31: #{tpu_custom_call.1} parent=19 // pred_region
          %p194 = scmp.lt.s32.totalorder %s16, 1
          %s195 = scalar_select %p194, %s16, 1
          %s196 = smul.addr %s195, 8
          %s197 = scalar_lea.vmem %s3, %s196
        $region32: #{tpu_custom_call.1} parent=19 // pred_fallthru
          _
      $region20: #{tpu_custom_call.1} parent=5 // pred_fallthru
        _
      %p198 = scmp.le.s32.totalorder 1, %s16
      %p199 = scmp.lt.s32.totalorder %s16, 3
      %p200 = pnand %p198, %p199
      %p201 = pneg %p200
      // Predicated region
      $region33: #{tpu_custom_call.1} parent=5 // pred_check
        _
      $region34: #{tpu_custom_call.1} parent=5 // pred_check_branch
        %203 = sbr.rel (%p200) target = $region36
      $region35: #{tpu_custom_call.1} parent=5 // pred_region
        %s204 = ssub.s32 %s16, 1
        %s205 = sand.u32 %s29, 1
        %s206 = scalar_lea.sflag [#allocation3], %s205
        %s207 = sand.u32 %s29, 1
        %s208 = smul.addr %s207, 32
        %s209 = scalar_lea.vmem [#allocation2], %s208
        // Predicated region
        $region37: #{tpu_custom_call.1} parent=35 // pred_check
          %p210 = pneg %p42
        $region38: #{tpu_custom_call.1} parent=35 // pred_check_branch
          %212 = sbr.rel (%p210) target = $region40
        $region39: #{tpu_custom_call.1} parent=35 // pred_region
          %213 = dma.done %s206, 512
        $region40: #{tpu_custom_call.1} parent=35 // pred_fallthru
          _
        %s214 = sand.u32 %s29, 1
        %s215 = scalar_lea.sflag [#allocation3], %s214
        %s216 = sand.u32 %s29, 1
        %s217 = smul.addr %s216, 32
        %s218 = scalar_lea.vmem [#allocation2], %s217
        %p219 = pneg %p42
        %p220 = pneg %p39
        %p221 = scmp.lt.s32.totalorder %s21, 1
        %s222 = scalar_select %p221, %s21, 1
        %s223 = smul.addr %s222, 8
        %s224 = scalar_lea.vmem %s1, %s223
        %p225 = pneg %p68
        %p226 = pneg %p65
        %p227 = pneg %p89
        %p228 = pneg %p86
        %p229 = scmp.lt.s32.totalorder %s21, 1
        %s230 = scalar_select %p229, %s21, 1
        %s231 = smul.addr %s230, 8
        %s232 = scalar_lea.vmem %s3, %s231
        %p233 = pneg %p115
        %p234 = pneg %p112
        %p235 = pneg %p141
        %p236 = pneg %p138
        %s237 = sand.u32 %s128, 1
        %s238 = scalar_lea.sflag [#allocation4], %s237
        %s239 = sand.u32 %s128, 1
        %s240 = smul.addr %s239, 8
        %s241 = scalar_lea.vmem [#allocation5], %s240
        %s242 = smul.u32 8, %s21
        %p243 = scmp.lt.s32.totalorder %s21, 1
        %s244 = scalar_select %p243, %s21, 1
        %s245 = smul.addr %s244, 8
        %s246 = scalar_lea.vmem %s1, %s245
        %p247 = scmp.lt.s32.totalorder %s21, 1
        %s248 = scalar_select %p247, %s21, 1
        %s249 = smul.addr %s248, 8
        %s250 = scalar_lea.vmem %s3, %s249
        %v252 = vld [vmem:[%s209] sm:$0xf]
        %v253 = vld [vmem:[%s209 + $0x4] sm:$0xf]
        %v254 = vld [vmem:[%s209 + $0x8] sm:$0xf]
        %v255 = vld [vmem:[%s209 + $0xc] sm:$0xf]
        %v256 = vld [vmem:[%s209 + $0x10] sm:$0xf]
        %v257 = vld [vmem:[%s209 + $0x14] sm:$0xf]
        %v258 = vld [vmem:[%s209 + $0x18] sm:$0xf]
        %v259 = vld [vmem:[%s209 + $0x1c] sm:$0xf]
        %v260 = vunpack.c.l.bf16 %v252
        %v261 = vunpack.c.l.bf16 %v253
        %v262 = vunpack.c.l.bf16 %v254
        %v263 = vunpack.c.l.bf16 %v255
        %v264 = vunpack.c.l.bf16 %v256
        %v265 = vunpack.c.l.bf16 %v257
        %v266 = vunpack.c.l.bf16 %v258
        %v267 = vunpack.c.l.bf16 %v259
        %v268 = vld [vmem:[%s246] sm:$0xff]
        %v269 = vld [vmem:[%s2] sm:$0xf]
        %v270 = vld [vmem:[%s2 + $0x4] sm:$0xf]
        %v271 = vld [vmem:[%s2 + $0x8] sm:$0xf]
        %v272 = vld [vmem:[%s2 + $0xc] sm:$0xf]
        %v273 = vld [vmem:[%s250] sm:$0xff]
        %v274 = vlaneseq
        %v275 = vshrl.u32 %v274, 7
        %v276 = vsub.s32 0, %v275
        %v277 = vrot.slane %v268, %v276
        %279 = vbcast.lane.b32.xlu0 %v277, 256
        %v280 = vpop.permute.xlu0 %279
        %v281 = vlaneseq
        %v282 = vshrl.u32 %v281, 7
        %v283 = vsub.s32 1, %v282
        %v284 = vrot.slane %v268, %v283
        %286 = vbcast.lane.b32.xlu0 %v284, 256
        %v287 = vpop.permute.xlu0 %286
        %v288 = vlaneseq
        %v289 = vshrl.u32 %v288, 7
        %v290 = vsub.s32 2, %v289
        %v291 = vrot.slane %v268, %v290
        %293 = vbcast.lane.b32.xlu0 %v291, 256
        %v294 = vpop.permute.xlu0 %293
        %v295 = vlaneseq
        %v296 = vshrl.u32 %v295, 7
        %v297 = vsub.s32 3, %v296
        %v298 = vrot.slane %v268, %v297
        %300 = vbcast.lane.b32.xlu0 %v298, 256
        %v301 = vpop.permute.xlu0 %300
        %v302 = vlaneseq
        %v303 = vshrl.u32 %v302, 7
        %v304 = vsub.s32 4, %v303
        %v305 = vrot.slane %v268, %v304
        %307 = vbcast.lane.b32.xlu0 %v305, 256
        %v308 = vpop.permute.xlu0 %307
        %v309 = vlaneseq
        %v310 = vshrl.u32 %v309, 7
        %v311 = vsub.s32 5, %v310
        %v312 = vrot.slane %v268, %v311
        %314 = vbcast.lane.b32.xlu0 %v312, 256
        %v315 = vpop.permute.xlu0 %314
        %v316 = vlaneseq
        %v317 = vshrl.u32 %v316, 7
        %v318 = vsub.s32 6, %v317
        %v319 = vrot.slane %v268, %v318
        %321 = vbcast.lane.b32.xlu0 %v319, 256
        %v322 = vpop.permute.xlu0 %321
        %v323 = vlaneseq
        %v324 = vshrl.u32 %v323, 7
        %v325 = vsub.s32 7, %v324
        %v326 = vrot.slane %v268, %v325
        %328 = vbcast.lane.b32.xlu0 %v326, 256
        %v329 = vpop.permute.xlu0 %328
        %v330 = vmul.f32 %v260, %v280
        %v331 = vmul.f32 %v261, %v287
        %v332 = vmul.f32 %v262, %v294
        %v333 = vmul.f32 %v263, %v301
        %v334 = vmul.f32 %v264, %v308
        %v335 = vmul.f32 %v265, %v315
        %v336 = vmul.f32 %v266, %v322
        %v337 = vmul.f32 %v267, %v329
        %vm338 = vcmask 261120
        %v339 = vsel %vm338, %v330, 0.0
        %v340 = vrot.slane %v339, 4
        %v341 = vadd.f32 %v339, %v340
        %v342 = vrot.slane %v341, 2
        %v343 = vadd.f32 %v341, %v342
        %v344 = vrot.slane %v343, 1
        %v345 = vadd.f32 %v343, %v344
        %v346 = vsel %vm338, %v331, 0.0
        %v347 = vrot.slane %v346, 4
        %v348 = vadd.f32 %v346, %v347
        %v349 = vrot.slane %v348, 2
        %v350 = vadd.f32 %v348, %v349
        %v351 = vrot.slane %v350, 1
        %v352 = vadd.f32 %v350, %v351
        %v353 = vsel %vm338, %v332, 0.0
        %v354 = vrot.slane %v353, 4
        %v355 = vadd.f32 %v353, %v354
        %v356 = vrot.slane %v355, 2
        %v357 = vadd.f32 %v355, %v356
        %v358 = vrot.slane %v357, 1
        %v359 = vadd.f32 %v357, %v358
        %v360 = vsel %vm338, %v333, 0.0
        %v361 = vrot.slane %v360, 4
        %v362 = vadd.f32 %v360, %v361
        %v363 = vrot.slane %v362, 2
        %v364 = vadd.f32 %v362, %v363
        %v365 = vrot.slane %v364, 1
        %v366 = vadd.f32 %v364, %v365
        %v367 = vsel %vm338, %v334, 0.0
        %v368 = vrot.slane %v367, 4
        %v369 = vadd.f32 %v367, %v368
        %v370 = vrot.slane %v369, 2
        %v371 = vadd.f32 %v369, %v370
        %v372 = vrot.slane %v371, 1
        %v373 = vadd.f32 %v371, %v372
        %v374 = vsel %vm338, %v335, 0.0
        %v375 = vrot.slane %v374, 4
        %v376 = vadd.f32 %v374, %v375
        %v377 = vrot.slane %v376, 2
        %v378 = vadd.f32 %v376, %v377
        %v379 = vrot.slane %v378, 1
        %v380 = vadd.f32 %v378, %v379
        %v381 = vsel %vm338, %v336, 0.0
        %v382 = vrot.slane %v381, 4
        %v383 = vadd.f32 %v381, %v382
        %v384 = vrot.slane %v383, 2
        %v385 = vadd.f32 %v383, %v384
        %v386 = vrot.slane %v385, 1
        %v387 = vadd.f32 %v385, %v386
        %v388 = vsel %vm338, %v337, 0.0
        %v389 = vrot.slane %v388, 4
        %v390 = vadd.f32 %v388, %v389
        %v391 = vrot.slane %v390, 2
        %v392 = vadd.f32 %v390, %v391
        %v393 = vrot.slane %v392, 1
        %v394 = vadd.f32 %v392, %v393
        %v395 = vpack.c.bf16 %v345, %v345
        %v396 = vpack.c.bf16 %v352, %v352
        %v397 = vpack.c.bf16 %v359, %v359
        %v398 = vpack.c.bf16 %v366, %v366
        %v399 = vpack.c.bf16 %v373, %v373
        %v400 = vpack.c.bf16 %v380, %v380
        %v401 = vpack.c.bf16 %v387, %v387
        %v402 = vpack.c.bf16 %v394, %v394
        %v411 = vunpack.c.l.b16 %v395
        %v412 = vunpack.c.l.b16 %v396
        %v413 = vunpack.c.l.b16 %v397
        %v414 = vunpack.c.l.b16 %v398
        %v415 = vunpack.c.l.b16 %v399
        %v416 = vunpack.c.l.b16 %v400
        %v417 = vunpack.c.l.b16 %v401
        %v418 = vunpack.c.l.b16 %v402
        %vm419 = vcmask 1041409
        %v420 = vsel %vm419, %v412, %v411
        %vm421 = vcmask 1042434
        %v422 = vsel %vm421, %v413, %v420
        %vm423 = vcmask 1043459
        %v424 = vsel %vm423, %v414, %v422
        %vm425 = vcmask 1044484
        %v426 = vsel %vm425, %v415, %v424
        %vm427 = vcmask 1045509
        %v428 = vsel %vm427, %v416, %v426
        %vm429 = vcmask 1046534
        %v430 = vsel %vm429, %v417, %v428
        %vm431 = vcmask 1047559
        %v432 = vsel %vm431, %v418, %v430
        %v433 = vpack.c.b16 %v432, %v432
        %v438 = vunpack.c.l.b16 %v269
        %v439 = vunpack.c.l.b16 %v270
        %v440 = vunpack.c.l.b16 %v271
        %v441 = vunpack.c.l.b16 %v272
        %v442 = vpack.c.b16 %v439, %v438
        %v443 = vpack.c.b16 %v441, %v440
        %v447 = vsel %vm338, %v433, 0
        %449 = vmatprep.subr.bf16.mxu0 0
        %450 = vmatpush1.bf16.msra.mxu0 %v442
        %451 = vmatprep.subr.bf16.mxu0 0
        %452 = vmatpush1.bf16.msra.mxu0 %v443
        %453 = vmatprep.subr.bf16.mxu0 0
        %454 = vmatpush1.bf16.msra.mxu0 0
        %455 = vmatprep.subr.bf16.mxu0 0
        %456 = vmatpush1.bf16.msra.mxu0 0
        %457 = vmatprep.subr.bf16.mxu0 0
        %458 = vmatpush1.bf16.msra.mxu0 0
        %459 = vmatprep.subr.bf16.mxu0 0
        %460 = vmatpush1.bf16.msra.mxu0 0
        %461 = vmatprep.subr.bf16.mxu0 0
        %462 = vmatpush1.bf16.msra.mxu0 0
        %463 = vmatprep.subr.bf16.mxu0 0
        %464 = vmatpush1.bf16.msra.mxu0 0
        %465 = vmatprep.subr.bf16.mxu0 0
        %466 = vmatpush1.bf16.msra.mxu0 0
        %467 = vmatprep.subr.bf16.mxu0 0
        %468 = vmatpush1.bf16.msra.mxu0 0
        %469 = vmatprep.subr.bf16.mxu0 0
        %470 = vmatpush1.bf16.msra.mxu0 0
        %471 = vmatprep.subr.bf16.mxu0 0
        %472 = vmatpush1.bf16.msra.mxu0 0
        %473 = vmatprep.subr.bf16.mxu0 0
        %474 = vmatpush1.bf16.msra.mxu0 0
        %475 = vmatprep.subr.bf16.mxu0 0
        %476 = vmatpush1.bf16.msra.mxu0 0
        %477 = vmatprep.subr.bf16.mxu0 0
        %478 = vmatpush1.bf16.msra.mxu0 0
        %479 = vmatprep.subr.bf16.mxu0 0
        %480 = vmatpush1.bf16.msra.mxu0 0
        %481 = vmatprep.mubr.bf16.mxu0 0
        %482 = vmatmul.mubr.bf16.gmra.mrb[0].mxu0 %v447
        %v483 = vpop.f32.mrb[0].mxu0
        %v484 = vadd.f32 0.0, %v483
        %v485 = vpop.f32.mrb[0].mxu0
        %v486 = vpop.f32.mrb[0].mxu0
        %v487 = vpop.f32.mrb[0].mxu0
        %488 = vdwg.mxu0
        %vm489 = vcmask 15360
        %v490 = vsel %vm489, %v484, -inf
        %491 = vmax.xlane.f32.xlu0 %v490
        %v492 = vpop.xlane.xlu0 %491
        %v493 = vsub.f32 %v484, %v492
        %v494 = vmul.f32 %v493, 1.442695
        %v495 = vpow.pop %v494
        %v496 = vsel %vm489, %v495, 0.0
        %497 = vadd.xlane.f32.xlu0 %v496
        %v498 = vpop.xlane.xlu0 %497
        %v499 = vlog2.pop %v498
        %v500 = vmul.f32 %v499, 0.6931472
        %v501 = vsub.f32 %v493, %v500
        %vm502 = vcmp.gt.f32.partialorder %v273, 0.0
        %v503 = vsel %vm502, %v273, 1.0
        %v504 = vlog2.pop %v503
        %v505 = vmul.f32 %v504, 0.6931472
        %v506 = vmul.f32 %v273, %v505
        %v507 = vmul.f32 %v273, %v501
        %v508 = vsub.f32 %v506, %v507
        %v509 = vsel %vm489, %v508, 0.0
        %510 = vadd.xlane.f32.xlu0 %v509
        %v511 = vpop.xlane.xlu0 %510
        %v512 = vlaneseq
        %v513 = vand.u32 %v512, 127
        %vm514 = vcmp.eq.s32.totalorder %v513, 0
        %vm515 = vcmp.eq.s32.totalorder %v513, 1
        %vm516 = vcmp.eq.s32.totalorder %v513, 2
        %v517 = vsel %vm516, %v511, 0.0
        %519 = vset.pattern.permute.xlu0 1
        %520 = vperm.xlu0 %519, %v501
        %v521 = vpop.permute.xlu0 %520
        %v523 = vsel %vm515, %v521, %v517
        %524 = vset.pattern.permute.xlu0 0
        %525 = vperm.xlu0 %524, %v501
        %v526 = vpop.permute.xlu0 %525
        %v528 = vsel %vm514, %v526, %v523
        %529 = vst [vmem:[%s241] sm:$0xff] %v528
        %s530 = sand.u32 %s128, 1
        %s531 = scalar_lea.sflag [#allocation4], %s530
        %s532 = sand.u32 %s128, 1
        %s533 = smul.addr %s532, 8
        %s534 = scalar_lea.vmem [#allocation5], %s533
        // Predicated region
        $region41: #{tpu_custom_call.1} parent=35 // pred_check
          %p535 = pneg %p138
        $region42: #{tpu_custom_call.1} parent=35 // pred_check_branch
          %537 = sbr.rel (%p535) target = $region44
        $region43: #{tpu_custom_call.1} parent=35 // pred_region
          %s539 = ssub.s32 128, 128
          %540 = vsyncadd %s531, %s539
          %s541 = smul.addr %s21, 128
          %s542 = scalar_lea.hbm %s4, %s541
          %s544 = sshll.u32 %s534, 4
          %s545 = int_to_ptr.vmem [resolvable:$true] %s544
          %547 = dma.vmem_to_hbm [thread:$0]  %s545, 128, %s542, %s531
        $region44: #{tpu_custom_call.1} parent=35 // pred_fallthru
          _
      $region36: #{tpu_custom_call.1} parent=5 // pred_fallthru
        _
      %p548 = scmp.le.s32.totalorder 2, %s16
      // Predicated region
      $region45: #{tpu_custom_call.1} parent=5 // pred_check
        %p549 = pneg %p548
      $region46: #{tpu_custom_call.1} parent=5 // pred_check_branch
        %551 = sbr.rel (%p549) target = $region48
      $region47: #{tpu_custom_call.1} parent=5 // pred_region
        %s552 = ssub.s32 %s16, 2
        // Predicated region
        $region49: #{tpu_custom_call.1} parent=47 // pred_check
          %p553 = pneg %p144
        $region50: #{tpu_custom_call.1} parent=47 // pred_check_branch
          %555 = sbr.rel (%p553) target = $region52
        $region51: #{tpu_custom_call.1} parent=47 // pred_region
          %s556 = sand.u32 %s129, 1
          %s557 = scalar_lea.sflag [#allocation4], %s556
          %s558 = sand.u32 %s129, 1
          %s559 = smul.addr %s558, 8
          %s560 = scalar_lea.vmem [#allocation5], %s559
          %561 = dma.done %s557, 128
        $region52: #{tpu_custom_call.1} parent=47 // pred_fallthru
          _
      $region48: #{tpu_custom_call.1} parent=5 // pred_fallthru
        _
    $region6: #{tpu_custom_call.1} parent=1 // loop_footer
      %s20 = sadd.s32 1, %s16
    $region7: #{tpu_custom_call.1} parent=1 // loop_footer_branch
      %15 = sbr.rel target = $region3
    $region8: #{tpu_custom_call.1} parent=1 // loop_exit
      _
    %562 = vsyncpa [#allocation3], 1
    %s563 = scalar_lea.sflag [#allocation3], 1
    %564 = vsyncpa %s563, 1
    %565 = vsyncpa [#allocation4], 1
    %s566 = scalar_lea.sflag [#allocation4], 1
    %567 = vsyncpa %s566, 1

</llo_original>
